<compile_context>
chip_gen: v7x
topology: tpu7x:2x2x1
jax: 0.10.0
libtpu: 0.0.40
codegen_flags: <defaults>
</compile_context>

<pallas_src>
import jax
import jax.numpy as jnp
from jax.experimental import pallas as pl
from jax.experimental.pallas import tpu as pltpu


def _round_up(x, m):
    return ((x + m - 1) // m) * m


# --------------------------------------------------------------------------- #
# Kernels
# --------------------------------------------------------------------------- #
def _linear_relu_kernel_single(x_ref, w_ref, b_ref, o_ref):
    # Single-K fast path: whole reduction in one block; no scratch, no pl.when.
    acc = jnp.dot(x_ref[...], w_ref[...], preferred_element_type=jnp.float32)
    acc = acc + b_ref[...].astype(jnp.float32)
    o_ref[...] = jnp.maximum(acc, 0.0).astype(o_ref.dtype)


def _linear_relu_kernel_acc(x_ref, w_ref, b_ref, o_ref, acc_ref):
    # K-tiled path: f32 VMEM accumulator, resident across the last (sequential,
    # "arbitrary") K grid axis.  Init at k==0, bias+ReLU epilogue at k==last.
    k = pl.program_id(2)

    @pl.when(k == 0)
    def _init():
        acc_ref[...] = jnp.zeros_like(acc_ref)

    acc_ref[...] += jnp.dot(
        x_ref[...], w_ref[...], preferred_element_type=jnp.float32
    )

    @pl.when(k == pl.num_programs(2) - 1)
    def _finalize():
        acc = acc_ref[...] + b_ref[...].astype(jnp.float32)
        o_ref[...] = jnp.maximum(acc, 0.0).astype(o_ref.dtype)


# --------------------------------------------------------------------------- #
# One-time parameter preparation (hoisted out of the per-call path)
# --------------------------------------------------------------------------- #
def prepare_linear_params(weight, bias, *, tk=512, compute_dtype=None):
    """Prepare PyTorch nn.Linear params for the Pallas kernel (done once).

    weight: [F_out, F_in]  (PyTorch layout), bias: [F_out].
    Returns (w_t, b_p, F_out) with
      w_t: [K, N] = W.T, N padded to a multiple of 128 (lane-dense output);
                    K is left at F_in when a single reduction block suffices,
                    else padded to a multiple of 128 for K tiling.
      b_p: [1, N] f32 bias row.
    """
    F_out, F_in = weight.shape
    if compute_dtype is not None:
        weight = weight.astype(compute_dtype)

    N = _round_up(F_out, 128)                     # lane-dense output columns
    K = F_in if F_in <= tk else _round_up(F_in, 128)

    w_t = weight.T
    if (K, N) != (F_in, F_out):
        w_t = jnp.zeros((K, N), w_t.dtype).at[:F_in, :F_out].set(w_t)
    b_p = jnp.zeros((1, N), jnp.float32).at[0, :F_out].set(
        bias.astype(jnp.float32))
    return w_t, b_p, F_out


# --------------------------------------------------------------------------- #
# Pallas forward
# --------------------------------------------------------------------------- #
def _linear_relu_pallas(x, w_t, b_p, f_out, *, out_dtype=None,
                        tm=256, tn=256, tk=512):
    B, F_in = x.shape
    K, N = w_t.shape
    out_dtype = out_dtype if out_dtype is not None else x.dtype
    in_itemsize = jnp.dtype(x.dtype).itemsize

    # M (batch): full-extent block when B fits one tile (no pad, no sublane rule).
    if B <= tm:
        tm_eff, M = B, B
    else:
        tm_eff = tm
        M = _round_up(B, tm_eff)

    # N (output): lane-dense (multiple of 128) from prepare; when tn covers N,
    # x is streamed exactly once over the grid.
    tn_eff = N if N <= tn else (tn if N % tn == 0 else 128)

    # K (reduction): one full-extent block when possible, else 128-aligned tiles.
    tk_eff = K if K <= tk else (tk if K % tk == 0 else 128)

    # Pad x only when genuinely needed (large unaligned B, or K-tiled path).
    if (M, K) != (B, F_in):
        x = jnp.zeros((M, K), x.dtype).at[:B, :F_in].set(x)

    cost = pl.CostEstimate(
        flops=2 * M * N * K,
        bytes_accessed=(M * K + K * N) * in_itemsize
        + M * N * jnp.dtype(out_dtype).itemsize,
        transcendentals=0,
    )

    single_k = (K == tk_eff)
    if single_k:
        grid = (M // tm_eff, N // tn_eff)
        kernel = _linear_relu_kernel_single
        in_specs = [
            pl.BlockSpec((tm_eff, tk_eff), lambda i, j: (i, 0)),
            pl.BlockSpec((tk_eff, tn_eff), lambda i, j: (0, j)),
            pl.BlockSpec((1, tn_eff), lambda i, j: (0, j)),
        ]
        out_specs = pl.BlockSpec((tm_eff, tn_eff), lambda i, j: (i, j))
        scratch_shapes = ()
        dims = ("parallel", "parallel")
    else:
        grid = (M // tm_eff, N // tn_eff, K // tk_eff)
        kernel = _linear_relu_kernel_acc
        in_specs = [
            pl.BlockSpec((tm_eff, tk_eff), lambda i, j, k: (i, k)),
            pl.BlockSpec((tk_eff, tn_eff), lambda i, j, k: (k, j)),
            pl.BlockSpec((1, tn_eff), lambda i, j, k: (0, j)),
        ]
        out_specs = pl.BlockSpec((tm_eff, tn_eff), lambda i, j, k: (i, j))
        scratch_shapes = (pltpu.VMEM((tm_eff, tn_eff), jnp.float32),)
        dims = ("parallel", "parallel", "arbitrary")

    out_p = pl.pallas_call(
        kernel,
        out_shape=jax.ShapeDtypeStruct((M, N), out_dtype),
        grid=grid,
        in_specs=in_specs,
        out_specs=out_specs,
        scratch_shapes=scratch_shapes,
        compiler_params=pltpu.CompilerParams(
            dimension_semantics=dims,
            # Default tiles need only a few MiB double-buffered; 32 MiB leaves
            # headroom for tile sweeps and stays well under v7x's 64 MiB VMEM.
            vmem_limit_bytes=32 * 1024 * 1024,
        ),
        cost_estimate=cost,
    )(x, w_t, b_p)

    if (M, N) != (B, f_out):
        out_p = out_p[:B, :f_out]
    return out_p


def make_test_model_forward(weight, bias, *, compute_dtype=None,
                            tm=256, tn=256, tk=512):
    """Build forward(x) = relu(x @ weight.T + bias), params prepared once."""
    w_t, b_p, f_out = prepare_linear_params(
        weight, bias, tk=tk, compute_dtype=compute_dtype)

    def forward(x):
        out_dtype = x.dtype
        if compute_dtype is not None:
            x = x.astype(compute_dtype)
        return _linear_relu_pallas(x, w_t, b_p, f_out, out_dtype=out_dtype,
                                   tm=tm, tn=tn, tk=tk)

    return forward


def test_model_forward(x, weight, bias, **kwargs):
    """One-shot convenience wrapper (prefer make_test_model_forward for reuse)."""
    return make_test_model_forward(weight, bias, **kwargs)(x)


# TODO(synk): fit_step (F.cross_entropy loss + DataLoader training loop) is
# training-side machinery, not part of the module forward; not implemented.

if __name__ == "__main__":
    # Shapes consistent with the module: batch=8, in_feats=32,
    # out_feats=NUM_CLASSES=2.
    B, IN_FEATS, OUT_FEATS = 8, 32, 2

    key = jax.random.PRNGKey(0)
    kx, kw, kb = jax.random.split(key, 3)

    # Mimic nn.Linear's uniform(-1/sqrt(in), 1/sqrt(in)) init.
    bound = 1.0 / (IN_FEATS ** 0.5)
    weight = jax.random.uniform(kw, (OUT_FEATS, IN_FEATS), jnp.float32,
                                -bound, bound)
    bias = jax.random.uniform(kb, (OUT_FEATS,), jnp.float32, -bound, bound)
    x = jax.random.normal(kx, (B, IN_FEATS), jnp.float32)

    ref = jnp.maximum(x @ weight.T + bias, 0.0)

    # --- f32 path: single-K fast path, x unpadded, W.T prepared once --------
    fwd = make_test_model_forward(weight, bias)
    out = fwd(x)
    jax.block_until_ready(out)
    assert out.shape == (B, OUT_FEATS)
    assert jnp.allclose(out, ref, atol=1e-5, rtol=1e-5), "f32 path mismatch"

    # --- bf16 compute path (MXU peak on v5e/v6e/v7x; f32 accumulation) ------
    fwd_bf16 = make_test_model_forward(weight, bias, compute_dtype=jnp.bfloat16)
    out_bf16 = fwd_bf16(x)
    jax.block_until_ready(out_bf16)
    assert out_bf16.shape == (B, OUT_FEATS)
    assert jnp.allclose(out_bf16, ref, atol=2e-2, rtol=2e-2), "bf16 mismatch"

    # --- unaligned small shapes: full-extent blocks, no x padding at all ----
    kx2, kw2, kb2 = jax.random.split(jax.random.PRNGKey(1), 3)
    B2, F_IN2, F_OUT2 = 200, 300, 130
    x2 = jax.random.normal(kx2, (B2, F_IN2), jnp.float32)
    w2 = jax.random.normal(kw2, (F_OUT2, F_IN2), jnp.float32) * 0.05
    b2 = jax.random.normal(kb2, (F_OUT2,), jnp.float32)
    out2 = test_model_forward(x2, w2, b2)
    jax.block_until_ready(out2)
    ref2 = jnp.maximum(x2 @ w2.T + b2, 0.0)
    assert out2.shape == (B2, F_OUT2)
    assert jnp.allclose(out2, ref2, atol=1e-3, rtol=1e-3), "unaligned mismatch"

    # --- larger layer: exercises the K-tiled accumulator + multi-tile grid --
    kx3, kw3, kb3 = jax.random.split(jax.random.PRNGKey(2), 3)
    B3, F_IN3, F_OUT3 = 512, 1024, 256
    x3 = jax.random.normal(kx3, (B3, F_IN3), jnp.float32)
    w3 = jax.random.normal(kw3, (F_OUT3, F_IN3), jnp.float32) * 0.03
    b3 = jax.random.normal(kb3, (F_OUT3,), jnp.float32)
    out3 = test_model_forward(x3, w3, b3, tm=256, tn=128, tk=512)
    jax.block_until_ready(out3)
    ref3 = jnp.maximum(x3 @ w3.T + b3, 0.0)
    assert out3.shape == (B3, F_OUT3)
    assert jnp.allclose(out3, ref3, atol=2e-2, rtol=2e-2), "tiled mismatch"

    print("KERNEL_OK")
</pallas_src>

<mosaic_0001>
module attributes {stable_mosaic.version = 11 : i64} {
  func.func @_linear_relu_kernel_single(%arg0: i32, %arg1: i32, %arg2: memref<8x32xf32, #tpu.memory_space<vmem>>, %arg3: memref<32x128xf32, #tpu.memory_space<vmem>>, %arg4: memref<1x128xf32, #tpu.memory_space<vmem>>, %arg5: memref<8x128xf32, #tpu.memory_space<vmem>>) attributes {dimension_semantics = [#tpu.dimension_semantics<parallel>, #tpu.dimension_semantics<parallel>], iteration_bounds = array<i64: 1, 1>, scalar_prefetch = 0 : i64, scratch_operands = 0 : i64, tpu.core_type = #tpu.core_type<tc>, window_params = [{transform_indices = @transform_0, window_bounds = array<i64: 8, 32>}, {transform_indices = @transform_1, window_bounds = array<i64: 32, 128>}, {transform_indices = @transform_2, window_bounds = array<i64: 1, 128>}, {transform_indices = @transform_3, window_bounds = array<i64: 8, 128>}]} {
    %c0 = arith.constant 0 : index
    %c0_0 = arith.constant 0 : index
    %0 = vector.load %arg2[%c0, %c0_0] : memref<8x32xf32, #tpu.memory_space<vmem>>, vector<8x32xf32>
    %c0_1 = arith.constant 0 : index
    %c0_2 = arith.constant 0 : index
    %1 = vector.load %arg3[%c0_1, %c0_2] : memref<32x128xf32, #tpu.memory_space<vmem>>, vector<32x128xf32>
    %cst = arith.constant dense<0.000000e+00> : vector<8x128xf32>
    %2 = tpu.matmul %0, %1, %cst {dimension_numbers = #tpu.dot_dimension_numbers<[1], [0], [0], [1], [0, 0, 1, 1], [], []>} : vector<8x32xf32>, vector<32x128xf32>, vector<8x128xf32> -> vector<8x128xf32>
    %c0_3 = arith.constant 0 : index
    %c0_4 = arith.constant 0 : index
    %3 = vector.load %arg4[%c0_3, %c0_4] : memref<1x128xf32, #tpu.memory_space<vmem>>, vector<1x128xf32>
    %4 = vector.broadcast %3 : vector<1x128xf32> to vector<8x128xf32>
    %5 = arith.addf %2, %4 : vector<8x128xf32>
    %cst_5 = arith.constant 0.000000e+00 : f32
    %6 = vector.broadcast %cst_5 : f32 to vector<8x128xf32>
    %7 = arith.maximumf %5, %6 : vector<8x128xf32>
    %c0_6 = arith.constant 0 : index
    %c0_7 = arith.constant 0 : index
    %8 = vector.load %arg5[%c0_6, %c0_7] : memref<8x128xf32, #tpu.memory_space<vmem>>, vector<8x128xf32>
    tpu.vector_store %arg5[%c0_6, %c0_7], %7 {strides = array<i32>} : memref<8x128xf32, #tpu.memory_space<vmem>>, vector<8x128xf32>,
    return
  }
  func.func @transform_0(%arg0: i32, %arg1: i32) -> (i32, i32) {
    %c0_i32 = arith.constant 0 : i32
    %c0_i32_0 = arith.constant 0 : i32
    return %arg0, %c0_i32 : i32, i32
  }
  func.func @transform_1(%arg0: i32, %arg1: i32) -> (i32, i32) {
    %c0_i32 = arith.constant 0 : i32
    %c0_i32_0 = arith.constant 0 : i32
    return %c0_i32, %arg1 : i32, i32
  }
  func.func @transform_2(%arg0: i32, %arg1: i32) -> (i32, i32) {
    %c0_i32 = arith.constant 0 : i32
    %c0_i32_0 = arith.constant 0 : i32
    return %c0_i32, %arg1 : i32, i32
  }
  func.func @transform_3(%arg0: i32, %arg1: i32) -> (i32, i32) {
    %c0_i32 = arith.constant 0 : i32
    return %arg0, %arg1 : i32, i32
  }
}

</mosaic_0001>

<llo_original>
// kernel: tpu_custom_call.1
$region0: #{tpu_custom_call.1}
  #allocation0 [shape = 'u32[]', space=smem, size = 0x4, offset = 0x4, fixed_abs, tag = 'smem constant byte address 0x4 - core index']
  #allocation1 [shape = 'u32[144,128]{1,0:T(1,128)}', space=vmem, size = 0x12000, scoped, tag = 'internal scratch']
  %s0 = inlined_call_operand.hbm [shape: f32[8,32], index: 0, kind: input, shape index: {}]
  %s1 = inlined_call_operand.hbm [shape: f32[32,128], index: 1, kind: input, shape index: {}]
  %s2 = inlined_call_operand.vmem [shape: f32[1,128], index: 2, kind: input, shape index: {}]
  %s3 = inlined_call_operand.hbm [shape: f32[8,128], index: 3, kind: output, shape index: {}]
  %s4 = sld [smem:[#allocation0]]
  $region30: #{tpu_custom_call.1} parent=0
    _
  %s6 = ssub.s32 1, %s4
  %s7 = scalar_select 0, %s6, %s4
  $region1: #{tpu_custom_call.1} parent=0
    #allocation2 [shape = 'u8[4096]{0}', space=vmem, size = 0x1000, scoped, tag = 'input window, operand 0, single buffered']
    #allocation3 [shape = 's32[1]{0}', space=sflag, size = 0x4, scoped, tag = 'scoped memory for tpu_custom_call.1']
    #allocation4 [shape = 's32[1]{0}', space=sflag, size = 0x4, scoped, tag = 'scoped memory for tpu_custom_call.1']
    #allocation5 [shape = 'u8[16384]{0}', space=vmem, size = 0x4000, scoped, tag = 'input window, operand 1, single buffered']
    #allocation6 [shape = 's32[1]{0}', space=sflag, size = 0x4, scoped, tag = 'scoped memory for tpu_custom_call.1']
    #allocation7 [shape = 'u8[4096]{0}', space=vmem, size = 0x1000, scoped, tag = 'output window, operand 0, single buffered']
    %8 = vsyncpa [#allocation3], 0
    %9 = vsyncpa [#allocation6], 0
    %10 = vsyncpa [#allocation4], 0
    // Predicated region
    $region2: #{tpu_custom_call.1} parent=1 // pred_check
      _
    $region3: #{tpu_custom_call.1} parent=1 // pred_check_branch
      %12 = sbr.rel (0) target = $region5
    $region4: #{tpu_custom_call.1} parent=1 // pred_region
      %s14 = ssub.s32 128, 128
      %15 = vsyncadd [#allocation3], %s14
      %s17 = sshll.u32 [#allocation2], 4
      %s18 = int_to_ptr.vmem [resolvable:$true] %s17
      %20 = dma.hbm_to_vmem [thread:$0]  %s0, 128, %s18, [#allocation3]
    $region5: #{tpu_custom_call.1} parent=1 // pred_fallthru
      _
    // Predicated region
    $region6: #{tpu_custom_call.1} parent=1 // pred_check
      _
    $region7: #{tpu_custom_call.1} parent=1 // pred_check_branch
      %22 = sbr.rel (0) target = $region9
    $region8: #{tpu_custom_call.1} parent=1 // pred_region
      %s24 = ssub.s32 512, 512
      %25 = vsyncadd [#allocation6], %s24
      %s26 = sshll.u32 [#allocation5], 4
      %s27 = int_to_ptr.vmem [resolvable:$true] %s26
      %32 = dma.hbm_to_vmem [thread:$0]  %s1, 512, %s27, [#allocation6], 128, 128, 8
    $region9: #{tpu_custom_call.1} parent=1 // pred_fallthru
      _
    // Predicated region
    $region10: #{tpu_custom_call.1} parent=1 // pred_check
      _
    $region11: #{tpu_custom_call.1} parent=1 // pred_check_branch
      %34 = sbr.rel (0) target = $region13
    $region12: #{tpu_custom_call.1} parent=1 // pred_region
      _
    $region13: #{tpu_custom_call.1} parent=1 // pred_fallthru
      _
    // Predicated region
    $region14: #{tpu_custom_call.1} parent=1 // pred_check
      _
    $region15: #{tpu_custom_call.1} parent=1 // pred_check_branch
      %36 = sbr.rel (0) target = $region17
    $region16: #{tpu_custom_call.1} parent=1 // pred_region
      %37 = dma.done [#allocation3], 128
    $region17: #{tpu_custom_call.1} parent=1 // pred_fallthru
      _
    // Predicated region
    $region18: #{tpu_custom_call.1} parent=1 // pred_check
      _
    $region19: #{tpu_custom_call.1} parent=1 // pred_check_branch
      %39 = sbr.rel (0) target = $region21
    $region20: #{tpu_custom_call.1} parent=1 // pred_region
      %40 = dma.done [#allocation6], 512
    $region21: #{tpu_custom_call.1} parent=1 // pred_fallthru
      _
    %v41 = vld [vmem:[#allocation2] sm:$0xff]
    %v42 = vld [vmem:[#allocation5] sm:$0xff]
    %v43 = vld [vmem:[#allocation5 + $0x8] sm:$0xff]
    %v44 = vld [vmem:[#allocation5 + $0x10] sm:$0xff]
    %v45 = vld [vmem:[#allocation5 + $0x18] sm:$0xff]
    %v46 = vld [vmem:[%s2] sm:$0x1]
    %v48 = vlaneseq
    %v49 = vshrl.u32 %v48, 7
    %v50 = vsub.s32 0, %v49
    %v51 = vrot.slane %v46, %v50
    %vm53 = vcmask 261120
    %v55 = vsel %vm53, %v41, 0
    %57 = vmatprep.subr.mxu0 0.0
    %58 = vmatpush1.msra.mxu0 %v42
    %59 = vmatprep.subr.mxu0 0.0
    %60 = vmatpush1.msra.mxu0 %v43
    %61 = vmatprep.subr.mxu0 0.0
    %62 = vmatpush1.msra.mxu0 %v44
    %63 = vmatprep.subr.mxu0 0.0
    %64 = vmatpush1.msra.mxu0 %v45
    %65 = vmatprep.subr.mxu0 0.0
    %66 = vmatpush1.msra.mxu0 0.0
    %67 = vmatprep.subr.mxu0 0.0
    %68 = vmatpush1.msra.mxu0 0.0
    %69 = vmatprep.subr.mxu0 0.0
    %70 = vmatpush1.msra.mxu0 0.0
    %71 = vmatprep.subr.mxu0 0.0
    %72 = vmatpush1.msra.mxu0 0.0
    %73 = vmatprep.subr.mxu0 0.0
    %74 = vmatpush1.msra.mxu0 0.0
    %75 = vmatprep.subr.mxu0 0.0
    %76 = vmatpush1.msra.mxu0 0.0
    %77 = vmatprep.subr.mxu0 0.0
    %78 = vmatpush1.msra.mxu0 0.0
    %79 = vmatprep.subr.mxu0 0.0
    %80 = vmatpush1.msra.mxu0 0.0
    %81 = vmatprep.subr.mxu0 0.0
    %82 = vmatpush1.msra.mxu0 0.0
    %83 = vmatprep.subr.mxu0 0.0
    %84 = vmatpush1.msra.mxu0 0.0
    %85 = vmatprep.subr.mxu0 0.0
    %86 = vmatpush1.msra.mxu0 0.0
    %87 = vmatprep.subr.mxu0 0.0
    %88 = vmatpush1.msra.mxu0 0.0
    %89 = vmatprep.subr.mxu0 0.0
    %90 = vmatpush1.msra.mxu0 0.0
    %91 = vmatprep.subr.mxu0 0.0
    %92 = vmatpush1.msra.mxu0 0.0
    %93 = vmatprep.subr.mxu0 0.0
    %94 = vmatpush1.msra.mxu0 0.0
    %95 = vmatprep.subr.mxu0 0.0
    %96 = vmatpush1.msra.mxu0 0.0
    %97 = vmatprep.subr.mxu0 0.0
    %98 = vmatpush1.msra.mxu0 0.0
    %99 = vmatprep.subr.mxu0 0.0
    %100 = vmatpush1.msra.mxu0 0.0
    %101 = vmatprep.subr.mxu0 0.0
    %102 = vmatpush1.msra.mxu0 0.0
    %103 = vmatprep.subr.mxu0 0.0
    %104 = vmatpush1.msra.mxu0 0.0
    %105 = vmatprep.subr.mxu0 0.0
    %106 = vmatpush1.msra.mxu0 0.0
    %107 = vmatprep.subr.mxu0 0.0
    %108 = vmatpush1.msra.mxu0 0.0
    %109 = vmatprep.subr.mxu0 0.0
    %110 = vmatpush1.msra.mxu0 0.0
    %111 = vmatprep.subr.mxu0 0.0
    %112 = vmatpush1.msra.mxu0 0.0
    %113 = vmatprep.subr.mxu0 0.0
    %114 = vmatpush1.msra.mxu0 0.0
    %115 = vmatprep.subr.mxu0 0.0
    %116 = vmatpush1.msra.mxu0 0.0
    %117 = vmatprep.subr.mxu0 0.0
    %118 = vmatpush1.msra.mxu0 0.0
    %119 = vmatprep.subr.mxu0 0.0
    %120 = vmatpush1.msra.mxu0 0.0
    %121 = vmatprep.mubr.f32.mxu0 0.0
    %122 = vmatmul.mubr.f32.gmra.mrb[0].mxu0 %v55
    %v123 = vpop.f32.mrb[0].mxu0
    %v124 = vadd.f32 %v51, %v123
    %v125 = vpop.f32.mrb[0].mxu0
    %126 = vdwg.mxu0
    %v127 = vmax.f32 %v124, 0.0
    %128 = vst [vmem:[#allocation7] sm:$0xff] %v127
    // Predicated region
    $region22: #{tpu_custom_call.1} parent=1 // pred_check
      _
    $region23: #{tpu_custom_call.1} parent=1 // pred_check_branch
      %130 = sbr.rel (0) target = $region25
    $region24: #{tpu_custom_call.1} parent=1 // pred_region
      %s132 = ssub.s32 128, 128
      %133 = vsyncadd [#allocation4], %s132
      %s135 = sshll.u32 [#allocation7], 4
      %s136 = int_to_ptr.vmem [resolvable:$true] %s135
      %138 = dma.vmem_to_hbm [thread:$0]  %s136, 128, %s3, [#allocation4]
    $region25: #{tpu_custom_call.1} parent=1 // pred_fallthru
      _
    // Predicated region
    $region26: #{tpu_custom_call.1} parent=1 // pred_check
      _
    $region27: #{tpu_custom_call.1} parent=1 // pred_check_branch
      %140 = sbr.rel (0) target = $region29
    $region28: #{tpu_custom_call.1} parent=1 // pred_region
      %141 = dma.done [#allocation4], 128
    $region29: #{tpu_custom_call.1} parent=1 // pred_fallthru
      _
    %142 = vsyncpa [#allocation3], 1
    %143 = vsyncpa [#allocation6], 1
    %144 = vsyncpa [#allocation4], 1

</llo_original>
